<compile_context>
chip_gen: v5e
topology: v5e:2x2
jax: 0.10.0
libtpu: 0.0.40
codegen_flags: <defaults>
</compile_context>

<pallas_src>
import functools
from typing import NamedTuple

import jax
import jax.numpy as jnp
from jax.experimental import pallas as pl
from jax.experimental.pallas import tpu as pltpu


# --------------------------------------------------------------------------- #
# Kernels
# --------------------------------------------------------------------------- #
def _linear_kernel_fullk(x_ref, w_ref, o_ref):
    # x_ref: (tm, K)   VMEM tile of x (full padded K resident)
    # w_ref: (K, tn)   VMEM tile of the pre-transposed weight
    # o_ref: (tm, tn)  f32 output tile -- single MXU pass, no accumulator
    o_ref[...] = jnp.dot(
        x_ref[...], w_ref[...], preferred_element_type=jnp.float32
    ).astype(o_ref.dtype)


def _linear_kernel_ktiled(x_ref, w_ref, o_ref, acc_ref):
    # Fallback for problems whose full-K working set does not fit the VMEM
    # budget.  K is the innermost ("arbitrary") grid axis; acc is resident.
    @pl.when(pl.program_id(2) == 0)
    def _():
        acc_ref[...] = jnp.zeros_like(acc_ref)

    acc_ref[...] += jnp.dot(
        x_ref[...], w_ref[...], preferred_element_type=jnp.float32
    )

    @pl.when(pl.program_id(2) == pl.num_programs(2) - 1)
    def _():
        o_ref[...] = acc_ref[...].astype(o_ref.dtype)


# --------------------------------------------------------------------------- #
# Planning helpers
# --------------------------------------------------------------------------- #
def _round_up(v, m):
    return -(-v // m) * m


def _sublane_align(dtype):
    # Sub-32-bit dtypes pack along sublanes.
    return {4: 8, 2: 16, 1: 32}.get(jnp.dtype(dtype).itemsize, 8)


def _vmem_caps():
    """(tile_budget_bytes, vmem_limit_bytes) derived from physical VMEM."""
    cap = 128 << 20
    try:
        info = pltpu.get_tpu_info()
        cap = int(getattr(info, "vmem_capacity_bytes", cap))
    except Exception:
        pass
    # Keep the double-buffered working set well under physical VMEM:
    # ~48 MiB on v7x (64 MiB physical), ~96 MiB on v5e/v6e (128 MiB physical).
    budget = min((cap * 3) // 4, 96 << 20)
    limit = min(cap - (16 << 20), budget + (16 << 20))
    return budget, max(limit, budget)


class _Plan(NamedTuple):
    tm_cap: int       # batch-panel tile cap (actual tm = min(tm_cap, padded batch))
    tn: int           # class (vocab) tile, multiple of 128
    tk: int           # reduction tile, multiple of 128 (== k_pad -> full-K path)
    k_pad: int        # padded no_input
    n_pad: int        # padded classes
    vmem_limit: int   # vmem_limit_bytes for the compiler


def _plan_tiles(no_input, classes, in_dtype, *, tm_cap=512):
    in_size = jnp.dtype(in_dtype).itemsize
    budget, vmem_limit = _vmem_caps()

    tm_cap = max(256, _round_up(int(tm_cap), 256))  # MXU-friendly batch cap
    k_full = _round_up(no_input, 128)
    n_full = _round_up(classes, 128)

    tm = tm_cap                      # worst-case tm for budgeting
    tn = min(1024, n_full)           # lane-dense, multiple of 128 (>=256 when possible)
    tk = k_full                      # prefer full-K residency (x/W read once)

    def usage(tn_, tk_):
        kt = -(-k_full // tk_)
        u = 2 * (tm + tn_) * tk_ * in_size   # double-buffered x + W tiles
        u += 2 * tm * tn_ * 4                # double-buffered f32 output tile
        if kt > 1:
            u += tm * tn_ * 4                # f32 accumulator scratch (fallback)
        return u

    # Shrink the vocab tile first (keeps full-K residency), then give up
    # full-K only if unavoidable.
    while usage(tn, tk) > budget:
        if tn > 256:
            tn = max(256, _round_up(tn // 2, 128))
        elif tk > 512:
            tk = max(512, _round_up(tk // 2, 128))
        elif tn > 128:
            tn = 128
        elif tk > 128:
            tk = max(128, _round_up(tk // 2, 128))
        else:
            break

    k_pad = _round_up(no_input, tk)
    n_pad = _round_up(classes, tn)
    return _Plan(tm_cap=tm, tn=tn, tk=tk, k_pad=k_pad, n_pad=n_pad,
                 vmem_limit=int(vmem_limit))


# --------------------------------------------------------------------------- #
# One-time weight preparation (hoisted out of the per-call forward)
# --------------------------------------------------------------------------- #
def prepare_weight(weight, *, compute_dtype=None, tm_cap=512):
    """Cast + transpose + pad the nn.Linear weight once.

    weight: (classes, no_input).  Returns (w_prepped, plan) where w_prepped is
    (k_pad, n_pad) in `compute_dtype` (or the weight's dtype if None), laid out
    so the kernel is a plain (m,k)x(k,n) dot.
    """
    classes, no_input = weight.shape
    in_dtype = jnp.dtype(compute_dtype) if compute_dtype is not None else jnp.dtype(weight.dtype)
    plan = _plan_tiles(no_input, classes, in_dtype, tm_cap=tm_cap)
    w = jnp.asarray(weight).astype(in_dtype).T          # (no_input, classes)
    w = jnp.pad(w, ((0, plan.k_pad - no_input), (0, plan.n_pad - classes)))
    return jax.device_put(w), plan


# --------------------------------------------------------------------------- #
# Forward
# --------------------------------------------------------------------------- #
@functools.partial(jax.jit, static_argnames=("plan", "classes"))
def _forward_prepared(x, w_prepped, *, plan, classes):
    batch, no_input = x.shape
    in_dtype = w_prepped.dtype
    x = x.astype(in_dtype)

    m_align = _sublane_align(in_dtype)
    tm = min(plan.tm_cap, _round_up(batch, m_align))
    m_pad = _round_up(batch, tm)

    if (m_pad, plan.k_pad) != (batch, no_input):
        x = jnp.pad(x, ((0, m_pad - batch), (0, plan.k_pad - no_input)))

    grid_m = m_pad // tm
    grid_n = plan.n_pad // plan.tn
    grid_k = plan.k_pad // plan.tk

    itemsize = jnp.dtype(in_dtype).itemsize
    cost = pl.CostEstimate(
        flops=2 * m_pad * plan.n_pad * plan.k_pad,
        transcendentals=0,
        bytes_accessed=(m_pad * plan.k_pad + plan.k_pad * plan.n_pad) * itemsize
        + m_pad * plan.n_pad * 4,
    )

    if grid_k == 1:
        # Full-K residency: x block index is invariant while j (classes)
        # sweeps, so x is DMA'd once per batch panel; with grid_m == 1 the
        # weight streams from HBM exactly once.
        out = pl.pallas_call(
            _linear_kernel_fullk,
            out_shape=jax.ShapeDtypeStruct((m_pad, plan.n_pad), jnp.float32),
            grid_spec=pltpu.PrefetchScalarGridSpec(
                num_scalar_prefetch=0,
                grid=(grid_m, grid_n),
                in_specs=[
                    pl.BlockSpec((tm, plan.k_pad), lambda i, j: (i, 0)),
                    pl.BlockSpec((plan.k_pad, plan.tn), lambda i, j: (0, j)),
                ],
                out_specs=pl.BlockSpec((tm, plan.tn), lambda i, j: (i, j)),
            ),
            compiler_params=pltpu.CompilerParams(
                dimension_semantics=("parallel", "parallel"),
                vmem_limit_bytes=plan.vmem_limit,
            ),
            cost_estimate=cost,
        )(x, w_prepped)
    else:
        # K-tiled fallback (huge hidden sizes): classic accumulator matmul.
        out = pl.pallas_call(
            _linear_kernel_ktiled,
            out_shape=jax.ShapeDtypeStruct((m_pad, plan.n_pad), jnp.float32),
            grid_spec=pltpu.PrefetchScalarGridSpec(
                num_scalar_prefetch=0,
                grid=(grid_m, grid_n, grid_k),
                in_specs=[
                    pl.BlockSpec((tm, plan.tk), lambda i, j, k: (i, k)),
                    pl.BlockSpec((plan.tk, plan.tn), lambda i, j, k: (k, j)),
                ],
                out_specs=pl.BlockSpec((tm, plan.tn), lambda i, j, k: (i, j)),
                scratch_shapes=[pltpu.VMEM((tm, plan.tn), jnp.float32)],
            ),
            compiler_params=pltpu.CompilerParams(
                dimension_semantics=("parallel", "parallel", "arbitrary"),
                vmem_limit_bytes=plan.vmem_limit,
            ),
            cost_estimate=cost,
        )(x, w_prepped)

    if (m_pad, plan.n_pad) != (batch, classes):
        out = out[:batch, :classes]
    return out


def make_output_layer(weight, *, compute_dtype=jnp.bfloat16, tm_cap=512):
    """Serving-style factory: weight prep done once, returns forward(x).

    Default is bf16 MXU operands with f32 accumulation (recommended on
    v5e/v6e/v7x); pass compute_dtype=None for exact f32 PyTorch numerics.
    """
    classes = weight.shape[0]
    w_prepped, plan = prepare_weight(weight, compute_dtype=compute_dtype, tm_cap=tm_cap)

    def forward(x):
        return _forward_prepared(x, w_prepped, plan=plan, classes=classes)

    return forward


def output_layer_forward(x, weight, *, compute_dtype=None, tm_cap=512):
    """One-shot convenience (weight prep happens per call).

    x: (batch, no_input), weight: (classes, no_input) -> (batch, classes) f32.
    """
    classes = weight.shape[0]
    w_prepped, plan = prepare_weight(weight, compute_dtype=compute_dtype, tm_cap=tm_cap)
    return _forward_prepared(x, w_prepped, plan=plan, classes=classes)


# --------------------------------------------------------------------------- #
# Demo / self-test
# --------------------------------------------------------------------------- #
if __name__ == "__main__":
    batch, no_input, classes = 8, 32, 16

    key = jax.random.PRNGKey(0)
    kx, kw = jax.random.split(key)

    bound = 1.0 / (no_input ** 0.5)
    weight = jax.random.uniform(
        kw, (classes, no_input), jnp.float32, minval=-bound, maxval=bound
    )
    x = jax.random.normal(kx, (batch, no_input), jnp.float32)

    y_ref = x @ weight.T

    # Exact-numerics path (f32 MXU operands, matches PyTorch forward tightly).
    y_f32 = jax.block_until_ready(output_layer_forward(x, weight, compute_dtype=None))
    assert y_f32.shape == (batch, classes)
    assert jnp.allclose(y_f32, y_ref, atol=1e-5, rtol=1e-5)

    # Recommended serving path: weight cast/transposed/padded once,
    # bf16 MXU operands, f32 accumulation.  (Error grows ~O(sqrt(K)) * bf16 eps.)
    forward = make_output_layer(weight)  # default compute_dtype=bf16
    y_bf16 = jax.block_until_ready(forward(x))
    assert y_bf16.shape == (batch, classes)
    assert jnp.allclose(y_bf16, y_ref, atol=3e-2, rtol=3e-2)

    print("KERNEL_OK")
</pallas_src>

<mosaic_0001>
module attributes {stable_mosaic.version = 11 : i64} {
  func.func @_linear_kernel_fullk(%arg0: i32, %arg1: i32, %arg2: memref<8x128xf32, #tpu.memory_space<vmem>>, %arg3: memref<128x128xf32, #tpu.memory_space<vmem>>, %arg4: memref<8x128xf32, #tpu.memory_space<vmem>>) attributes {dimension_semantics = [#tpu.dimension_semantics<parallel>, #tpu.dimension_semantics<parallel>], iteration_bounds = array<i64: 1, 1>, scalar_prefetch = 0 : i64, scratch_operands = 0 : i64, tpu.core_type = #tpu.core_type<tc>, window_params = [{transform_indices = @transform_0, window_bounds = array<i64: 8, 128>}, {transform_indices = @transform_1, window_bounds = array<i64: 128, 128>}, {transform_indices = @transform_2, window_bounds = array<i64: 8, 128>}]} {
    %c0 = arith.constant 0 : index
    %c0_0 = arith.constant 0 : index
    %0 = vector.load %arg2[%c0, %c0_0] : memref<8x128xf32, #tpu.memory_space<vmem>>, vector<8x128xf32>
    %c0_1 = arith.constant 0 : index
    %c0_2 = arith.constant 0 : index
    %1 = vector.load %arg3[%c0_1, %c0_2] : memref<128x128xf32, #tpu.memory_space<vmem>>, vector<128x128xf32>
    %cst = arith.constant dense<0.000000e+00> : vector<8x128xf32>
    %2 = tpu.matmul %0, %1, %cst {dimension_numbers = #tpu.dot_dimension_numbers<[1], [0], [0], [1], [0, 0, 1, 1], [], []>} : vector<8x128xf32>, vector<128x128xf32>, vector<8x128xf32> -> vector<8x128xf32>
    %c0_3 = arith.constant 0 : index
    %c0_4 = arith.constant 0 : index
    %3 = vector.load %arg4[%c0_3, %c0_4] : memref<8x128xf32, #tpu.memory_space<vmem>>, vector<8x128xf32>
    tpu.vector_store %arg4[%c0_3, %c0_4], %2 {strides = array<i32>} : memref<8x128xf32, #tpu.memory_space<vmem>>, vector<8x128xf32>,
    return
  }
  func.func @transform_0(%arg0: i32, %arg1: i32) -> (i32, i32) {
    %c0_i32 = arith.constant 0 : i32
    %c0_i32_0 = arith.constant 0 : i32
    return %arg0, %c0_i32 : i32, i32
  }
  func.func @transform_1(%arg0: i32, %arg1: i32) -> (i32, i32) {
    %c0_i32 = arith.constant 0 : i32
    %c0_i32_0 = arith.constant 0 : i32
    return %c0_i32, %arg1 : i32, i32
  }
  func.func @transform_2(%arg0: i32, %arg1: i32) -> (i32, i32) {
    %c0_i32 = arith.constant 0 : i32
    return %arg0, %arg1 : i32, i32
  }
}

</mosaic_0001>

<llo_original>
// kernel: _forward_prepared.1
$region0: #{_forward_prepared.1}
  #allocation0 [shape = 'u32[]', space=smem, size = 0x4, offset = 0x4, fixed_abs, tag = 'smem constant byte address 0x4 - core index']
  #allocation1 [shape = 'u32[72,128]{1,0:T(1,128)}', space=vmem, size = 0x9000, scoped, tag = 'internal scratch']
  %s0 = inlined_call_operand.vmem [shape: f32[8,128], index: 0, kind: input, shape index: {}]
  %s1 = inlined_call_operand.hbm [shape: f32[128,128], index: 1, kind: input, shape index: {}]
  %s2 = inlined_call_operand.hbm [shape: f32[8,128], index: 2, kind: output, shape index: {}]
  %s3 = sld [smem:[#allocation0]]
  $region22: #{_forward_prepared.1} parent=0
    _
  %s5 = ssub.s32 1, %s3
  %s6 = scalar_select 0, %s5, %s3
  $region1: #{_forward_prepared.1} parent=0
    #allocation2 [shape = 'u8[65536]{0}', space=vmem, size = 0x10000, scoped, tag = 'input window, operand 1, single buffered']
    #allocation3 [shape = 's32[1]{0}', space=sflag, size = 0x4, scoped, tag = 'scoped memory for _forward_prepared.1']
    #allocation4 [shape = 's32[1]{0}', space=sflag, size = 0x4, scoped, tag = 'scoped memory for _forward_prepared.1']
    #allocation5 [shape = 'u8[4096]{0}', space=vmem, size = 0x1000, scoped, tag = 'output window, operand 0, single buffered']
    %7 = vsyncpa [#allocation3], 0
    %8 = vsyncpa [#allocation4], 0
    // Predicated region
    $region2: #{_forward_prepared.1} parent=1 // pred_check
      _
    $region3: #{_forward_prepared.1} parent=1 // pred_check_branch
      %10 = sbr.rel (0) target = $region5
    $region4: #{_forward_prepared.1} parent=1 // pred_region
      _
    $region5: #{_forward_prepared.1} parent=1 // pred_fallthru
      _
    // Predicated region
    $region6: #{_forward_prepared.1} parent=1 // pred_check
      _
    $region7: #{_forward_prepared.1} parent=1 // pred_check_branch
      %12 = sbr.rel (0) target = $region9
    $region8: #{_forward_prepared.1} parent=1 // pred_region
      %14 = vsyncadd [#allocation3], 0
      %s15 = sshll.u32 %s1, 4
      %s16 = int_to_ptr.hbm [resolvable:$true] %s15
      %s17 = sshll.u32 [#allocation2], 4
      %s18 = int_to_ptr.vmem [resolvable:$true] %s17
      %23 = dma.hbm_to_vmem [thread:$0]  %s16, 2048, %s18, [#allocation3], 128, 128, 8
    $region9: #{_forward_prepared.1} parent=1 // pred_fallthru
      _
    // Predicated region
    $region10: #{_forward_prepared.1} parent=1 // pred_check
      _
    $region11: #{_forward_prepared.1} parent=1 // pred_check_branch
      %25 = sbr.rel (0) target = $region13
    $region12: #{_forward_prepared.1} parent=1 // pred_region
      %27 = dma.done [#allocation3], 2048
    $region13: #{_forward_prepared.1} parent=1 // pred_fallthru
      _
    %v28 = vld [vmem:[%s0] sm:$0xff]
    %v29 = vld [vmem:[#allocation2] sm:$0xff]
    %v30 = vld [vmem:[#allocation2 + $0x8] sm:$0xff]
    %v31 = vld [vmem:[#allocation2 + $0x10] sm:$0xff]
    %v32 = vld [vmem:[#allocation2 + $0x18] sm:$0xff]
    %v33 = vld [vmem:[#allocation2 + $0x20] sm:$0xff]
    %v34 = vld [vmem:[#allocation2 + $0x28] sm:$0xff]
    %v35 = vld [vmem:[#allocation2 + $0x30] sm:$0xff]
    %v36 = vld [vmem:[#allocation2 + $0x38] sm:$0xff]
    %v37 = vld [vmem:[#allocation2 + $0x40] sm:$0xff]
    %v38 = vld [vmem:[#allocation2 + $0x48] sm:$0xff]
    %v39 = vld [vmem:[#allocation2 + $0x50] sm:$0xff]
    %v40 = vld [vmem:[#allocation2 + $0x58] sm:$0xff]
    %v41 = vld [vmem:[#allocation2 + $0x60] sm:$0xff]
    %v42 = vld [vmem:[#allocation2 + $0x68] sm:$0xff]
    %v43 = vld [vmem:[#allocation2 + $0x70] sm:$0xff]
    %v44 = vld [vmem:[#allocation2 + $0x78] sm:$0xff]
    %45 = vmatpush.msra.mxu0 %v44
    %46 = vmatpush.msra.mxu0 %v43
    %47 = vmatpush.msra.mxu0 %v42
    %48 = vmatpush.msra.mxu0 %v41
    %49 = vmatpush.msra.mxu0 %v40
    %50 = vmatpush.msra.mxu0 %v39
    %51 = vmatpush.msra.mxu0 %v38
    %52 = vmatpush.msra.mxu0 %v37
    %53 = vmatpush.msra.mxu0 %v36
    %54 = vmatpush.msra.mxu0 %v35
    %55 = vmatpush.msra.mxu0 %v34
    %56 = vmatpush.msra.mxu0 %v33
    %57 = vmatpush.msra.mxu0 %v32
    %58 = vmatpush.msra.mxu0 %v31
    %59 = vmatpush.msra.mxu0 %v30
    %60 = vmatpush.msra.mxu0 %v29
    %61 = vmatmul.f32.gmra.mxu0 %v28
    %v62 = vpop.f32.mrf.mxu0
    %v63 = vadd.f32 0.0, %v62
    %64 = vdwg.mxu0
    %65 = vst [vmem:[#allocation5] sm:$0xff] %v63
    // Predicated region
    $region14: #{_forward_prepared.1} parent=1 // pred_check
      _
    $region15: #{_forward_prepared.1} parent=1 // pred_check_branch
      %67 = sbr.rel (0) target = $region17
    $region16: #{_forward_prepared.1} parent=1 // pred_region
      %69 = vsyncadd [#allocation4], 0
      %s71 = sshll.u32 [#allocation5], 4
      %s72 = int_to_ptr.vmem [resolvable:$true] %s71
      %s73 = sshll.u32 %s2, 4
      %s74 = int_to_ptr.hbm [resolvable:$true] %s73
      %76 = dma.vmem_to_hbm [thread:$0]  %s72, 128, %s74, [#allocation4]
    $region17: #{_forward_prepared.1} parent=1 // pred_fallthru
      _
    // Predicated region
    $region18: #{_forward_prepared.1} parent=1 // pred_check
      _
    $region19: #{_forward_prepared.1} parent=1 // pred_check_branch
      %78 = sbr.rel (0) target = $region21
    $region20: #{_forward_prepared.1} parent=1 // pred_region
      %80 = dma.done [#allocation4], 128
    $region21: #{_forward_prepared.1} parent=1 // pred_fallthru
      _
    %81 = vsyncpa [#allocation3], 1
    %82 = vsyncpa [#allocation4], 1

</llo_original>
